<compile_context>
chip_gen: v5e
topology: v5e:2x2
jax: 0.10.0
libtpu: 0.0.40
codegen_flags: <defaults>
</compile_context>

<pallas_src>
import functools
import math

import jax
import jax.numpy as jnp
from jax import lax
from jax.experimental import pallas as pl
from jax.experimental.pallas import tpu as pltpu

# Large finite negative (not -inf): exp() of it underflows to exactly 0 and there is
# no inf-inf NaN hazard.  NOTE: m_scr is initialised to this value; that is safe only
# because under the strict causal mask every query row has at least one unmasked key.
DEFAULT_MASK_VALUE = -0.7 * float(jnp.finfo(jnp.float32).max)
_STATS_LANES = 128  # lane-replicated m/l softmax statistics (no masked partial stores)


def _bytes(shape, dtype):
    return math.prod(shape) * jnp.dtype(dtype).itemsize


def _vmem_limit(nbytes):
    # computed from actual buffer sizes, generous headroom, capped v7x-safe.
    return int(min(max(int(nbytes * 1.5), 32 * 1024 * 1024), 48 * 1024 * 1024))


# --------------------------------------------------------------------------- #
# 1) fused QKV projection: computed exactly once per sequence position         #
# --------------------------------------------------------------------------- #
def _qkv_proj_kernel(x_ref, w_ref, out_ref):
    out_ref[0] = jnp.dot(x_ref[0].astype(w_ref.dtype), w_ref[...],
                         preferred_element_type=jnp.float32).astype(out_ref.dtype)


def _qkv_projection(x, w_qkv, *, tile):
    """x: (B, S, D); w_qkv: (D, 3*H*dh) in compute dtype -> (B, S, 3*H*dh)."""
    B, S, D = x.shape
    n3 = w_qkv.shape[1]
    vlim = _vmem_limit(2 * _bytes((tile, D), x.dtype)
                       + _bytes((D, n3), w_qkv.dtype)
                       + 2 * _bytes((tile, n3), w_qkv.dtype))
    return pl.pallas_call(
        _qkv_proj_kernel,
        out_shape=jax.ShapeDtypeStruct((B, S, n3), w_qkv.dtype),
        grid_spec=pltpu.PrefetchScalarGridSpec(
            num_scalar_prefetch=0,
            grid=(B, S // tile),
            in_specs=[
                pl.BlockSpec((1, tile, D), lambda b, i: (b, i, 0)),
                # constant weight: resident, single-buffered
                pl.BlockSpec((D, n3), lambda b, i: (0, 0),
                             pipeline_mode=pl.Buffered(1)),
            ],
            out_specs=pl.BlockSpec((1, tile, n3), lambda b, i: (b, i, 0)),
        ),
        compiler_params=pltpu.CompilerParams(
            dimension_semantics=("parallel", "parallel"),
            vmem_limit_bytes=vlim,
        ),
    )(x, w_qkv)


# --------------------------------------------------------------------------- #
# 2) causal flash attention over a triangular (batch, step) grid               #
# --------------------------------------------------------------------------- #
def _mha_attn_kernel(qi_tab_ref, ki_tab_ref,                   # scalar prefetch (SMEM)
                     q_ref, k_ref, v_ref, wp_ref, bp_ref,      # inputs
                     out_ref,                                  # output
                     m_scr, l_scr, acc_scr,                    # scratch
                     *, num_head, tile, compute_dtype):
    t = pl.program_id(1)
    qi = qi_tab_ref[t]      # query-tile index of this step
    ki = ki_tab_ref[t]      # kv-tile index of this step (ki <= qi by construction)

    # ---- first contributing KV tile for this q tile: reset online-softmax state
    @pl.when(ki == 0)
    def _init():
        m_scr[...] = jnp.full_like(m_scr, DEFAULT_MASK_VALUE)
        l_scr[...] = jnp.zeros_like(l_scr)
        acc_scr[...] = jnp.zeros_like(acc_scr)

    q = q_ref[0]            # (H, tq, dh) head-major, pre-scaled by d_head**-0.5
    k = k_ref[0]            # (H, tk, dh)
    v = v_ref[0]            # (H, tk, dh)

    # head-batched scores (f32 accumulation on the MXU)
    s = jnp.einsum('hqd,hkd->hqk', q, k,
                   preferred_element_type=jnp.float32)         # (H, tq, tk)

    def _update(scores):
        # online softmax update; m/l are lane-replicated f32 statistics
        m_prev = m_scr[...]                                    # (H, tq, 128)
        m_new = jnp.maximum(m_prev, jnp.max(scores, axis=-1, keepdims=True))
        alpha = jnp.exp(m_prev - m_new)                        # (H, tq, 128)
        p = jnp.exp(scores - m_new[..., 0:1])                  # (H, tq, tk)
        l_scr[...] = alpha * l_scr[...] + jnp.sum(p, axis=-1, keepdims=True)
        acc_scr[...] = alpha[..., 0:1] * acc_scr[...] + jnp.einsum(
            'hqk,hkd->hqd', p.astype(compute_dtype), v,
            preferred_element_type=jnp.float32)
        m_scr[...] = m_new
        # TODO(synk): training-mode attention-weight dropout (pltpu.prng_*) here.

    # causal mask only on the diagonal tile; off-diagonal tiles are fully unmasked
    @pl.when(ki == qi)
    def _diag_step():
        r = lax.broadcasted_iota(jnp.int32, (tile, tile), 0)
        c = lax.broadcasted_iota(jnp.int32, (tile, tile), 1)
        _update(jnp.where(r >= c, s, DEFAULT_MASK_VALUE))

    @pl.when(ki < qi)
    def _offdiag_step():
        _update(s)

    # ---- finalize on the diagonal tile.  Valid only for the STRICT causal mask:
    #      the diagonal tile is the last contributing KV tile for this q tile.
    @pl.when(ki == qi)
    def _finalize():
        o = acc_scr[...] / l_scr[..., 0:1]                     # (H, tq, dh) exact normalize
        # head-concat + output projection fused: sum_h o[h] @ Wp[h] -> (tq, D) lane-dense
        proj = jnp.dot(o[0].astype(compute_dtype), wp_ref[0],
                       preferred_element_type=jnp.float32)
        for h in range(1, num_head):
            proj += jnp.dot(o[h].astype(compute_dtype), wp_ref[h],
                            preferred_element_type=jnp.float32)
        out_ref[0] = (proj + bp_ref[...]).astype(out_ref.dtype)
        # TODO(synk): training-mode output dropout not implemented (eval semantics).


def multi_head_attention(x, wq, wk, wv, wp, bp, *,
                         block_size=256, compute_dtype=jnp.bfloat16):
    """Forward pass of the PyTorch MultiHeadAttention module (eval mode).

    x  : (B, S, D)
    wq, wk, wv : (H, D, dh)  per-head weights (q = x @ wq[h], ...)
    wp : (D, H*dh)           output projection weight (PyTorch nn.Linear layout)
    bp : (D,)                output projection bias
    """
    B, S, D = x.shape
    H, _, dh = wq.shape
    HD = H * dh

    tile = min(block_size, S)
    assert S % tile == 0, "seq length must be a multiple of the tile size"
    n_tiles = S // tile

    # ---- free wrapper-side layout plumbing (done once, outside the kernels) ------
    scale = float(dh) ** -0.5
    wq_all = wq.transpose(1, 0, 2).reshape(D, HD) * scale      # fold softmax scale into Q
    wk_all = wk.transpose(1, 0, 2).reshape(D, HD)
    wv_all = wv.transpose(1, 0, 2).reshape(D, HD)
    w_qkv = jnp.concatenate([wq_all, wk_all, wv_all], axis=1).astype(compute_dtype)
    wp3 = wp.T.reshape(H, dh, D).astype(compute_dtype)         # (H, dh, D)
    bp2 = bp.reshape(1, D).astype(jnp.float32)

    # ---- 1) Q/K/V computed exactly once (no O(n_tiles^2) projection recompute) ---
    qkv = _qkv_projection(x, w_qkv, tile=tile)                 # (B, S, 3*H*dh)
    qkv = qkv.reshape(B, S, 3, H, dh).transpose(2, 0, 3, 1, 4) # (3, B, H, S, dh) head-major
    q, k, v = qkv[0], qkv[1], qkv[2]

    # ---- 2) triangular (qi, ki) enumeration: no dead steps above the diagonal ----
    qi_list, ki_list = [], []
    for qidx in range(n_tiles):
        for kidx in range(qidx + 1):
            qi_list.append(qidx)
            ki_list.append(kidx)
    qi_tab = jnp.asarray(qi_list, dtype=jnp.int32)
    ki_tab = jnp.asarray(ki_list, dtype=jnp.int32)
    n_steps = len(qi_list)                                     # n_tiles*(n_tiles+1)//2

    kernel = functools.partial(_mha_attn_kernel, num_head=H,
                               tile=tile, compute_dtype=compute_dtype)

    vlim = _vmem_limit(
        3 * 2 * _bytes((H, tile, dh), compute_dtype)           # q/k/v blocks, double-buffered
        + _bytes((H, dh, D), compute_dtype)                    # Wp (single-buffered)
        + _bytes((1, D), jnp.float32)
        + 2 * _bytes((tile, D), x.dtype)                       # output block, double-buffered
        + 2 * _bytes((H, tile, _STATS_LANES), jnp.float32)     # m / l scratch
        + _bytes((H, tile, dh), jnp.float32)                   # accumulator scratch
        + 2 * _bytes((H, tile, tile), jnp.float32))            # s / p intermediates

    # advisory cost estimate (attention kernel only; projections counted separately)
    flops = (B * n_steps * 4 * H * tile * tile * dh            # QK^T and PV
             + B * n_tiles * 2 * tile * HD * D)                # fused output projection
    transcendentals = B * n_steps * H * tile * tile
    itm = jnp.dtype(compute_dtype).itemsize
    bytes_accessed = int(B * n_tiles * H * tile * dh * itm      # Q read once per q tile
                         + 2 * B * n_steps * H * tile * dh * itm  # K/V per step
                         + H * dh * D * itm + D * 4
                         + B * S * D * x.dtype.itemsize)        # output

    out = pl.pallas_call(
        kernel,
        out_shape=jax.ShapeDtypeStruct((B, S, D), x.dtype),
        grid_spec=pltpu.PrefetchScalarGridSpec(
            num_scalar_prefetch=2,
            grid=(B, n_steps),
            in_specs=[
                pl.BlockSpec((1, H, tile, dh),
                             lambda b, t, qi_t, ki_t: (b, 0, qi_t[t], 0)),   # Q
                pl.BlockSpec((1, H, tile, dh),
                             lambda b, t, qi_t, ki_t: (b, 0, ki_t[t], 0)),   # K
                pl.BlockSpec((1, H, tile, dh),
                             lambda b, t, qi_t, ki_t: (b, 0, ki_t[t], 0)),   # V
                pl.BlockSpec((H, dh, D), lambda b, t, qi_t, ki_t: (0, 0, 0),
                             pipeline_mode=pl.Buffered(1)),                  # Wp (constant)
                pl.BlockSpec((1, D), lambda b, t, qi_t, ki_t: (0, 0),
                             pipeline_mode=pl.Buffered(1)),                  # bias (constant)
            ],
            out_specs=pl.BlockSpec((1, tile, D),
                                   lambda b, t, qi_t, ki_t: (b, qi_t[t], 0)),
            scratch_shapes=[
                pltpu.VMEM((H, tile, _STATS_LANES), jnp.float32),  # running max (lane-replicated)
                pltpu.VMEM((H, tile, _STATS_LANES), jnp.float32),  # running sum (lane-replicated)
                pltpu.VMEM((H, tile, dh), jnp.float32),            # output accumulator
            ],
        ),
        compiler_params=pltpu.CompilerParams(
            dimension_semantics=("parallel", "arbitrary"),
            vmem_limit_bytes=vlim,
        ),
        cost_estimate=pl.CostEstimate(flops=int(flops),
                                      transcendentals=int(transcendentals),
                                      bytes_accessed=bytes_accessed),
    )(qi_tab, ki_tab, q, k, v, wp3, bp2)
    return out


def _reference(x, wq, wk, wv, wp, bp):
    # pure-JAX reference mirroring the PyTorch module (eval mode)
    B, S, D = x.shape
    H, _, dh = wq.shape
    mask = jnp.tril(jnp.ones((S, S), dtype=bool))
    outs = []
    for h in range(H):
        q = x @ wq[h]
        k = x @ wk[h]
        v = x @ wv[h]
        w = (q @ jnp.swapaxes(k, -2, -1)) * (dh ** -0.5)
        w = jnp.where(mask, w, -jnp.inf)
        w = jax.nn.softmax(w, axis=-1)
        outs.append(w @ v)
    cat = jnp.concatenate(outs, axis=-1)
    return cat @ wp.T + bp


if __name__ == "__main__":
    # --- small shapes consistent with the module's forward -------------------------
    B, S, D = 2, 8, 32          # batch, SEQ_LENGTH, d_model
    H, dh = 4, 8                # num_head, d_head

    key = jax.random.PRNGKey(0)
    k_x, k_q, k_k, k_v, k_p, k_b = jax.random.split(key, 6)
    x = jax.random.normal(k_x, (B, S, D), dtype=jnp.float32)
    wq = jax.random.normal(k_q, (H, D, dh), dtype=jnp.float32) * (D ** -0.5)
    wk = jax.random.normal(k_k, (H, D, dh), dtype=jnp.float32) * (D ** -0.5)
    wv = jax.random.normal(k_v, (H, D, dh), dtype=jnp.float32) * (D ** -0.5)
    wp = jax.random.normal(k_p, (D, H * dh), dtype=jnp.float32) * ((H * dh) ** -0.5)
    bp = jax.random.normal(k_b, (D,), dtype=jnp.float32) * 0.01

    ref = _reference(x, wq, wk, wv, wp, bp)

    # exact-parity path (f32 matmuls) — matches the PyTorch module numerics
    out_f32 = jax.block_until_ready(
        multi_head_attention(x, wq, wk, wv, wp, bp, compute_dtype=jnp.float32))
    assert out_f32.shape == (B, S, D)
    assert jnp.allclose(out_f32, ref, atol=1e-4, rtol=1e-4), "f32 mismatch vs reference"

    # default fast path (bf16 MXU matmuls, f32 softmax statistics / accumulation)
    out_bf16 = jax.block_until_ready(multi_head_attention(x, wq, wk, wv, wp, bp))
    assert jnp.allclose(out_bf16, ref, atol=1.5e-1, rtol=1.5e-1), "bf16 mismatch vs reference"

    # --- multi-tile config: exercises the triangular grid + diagonal-only masking ---
    B2, S2, D2, H2, dh2 = 1, 512, 128, 4, 32
    k_x2, k_q2, k_k2, k_v2, k_p2, k_b2 = jax.random.split(jax.random.PRNGKey(1), 6)
    x2 = jax.random.normal(k_x2, (B2, S2, D2), dtype=jnp.float32)
    wq2 = jax.random.normal(k_q2, (H2, D2, dh2), dtype=jnp.float32) * (D2 ** -0.5)
    wk2 = jax.random.normal(k_k2, (H2, D2, dh2), dtype=jnp.float32) * (D2 ** -0.5)
    wv2 = jax.random.normal(k_v2, (H2, D2, dh2), dtype=jnp.float32) * (D2 ** -0.5)
    wp2 = jax.random.normal(k_p2, (D2, H2 * dh2), dtype=jnp.float32) * ((H2 * dh2) ** -0.5)
    bp2 = jax.random.normal(k_b2, (D2,), dtype=jnp.float32) * 0.01

    out2 = jax.block_until_ready(
        multi_head_attention(x2, wq2, wk2, wv2, wp2, bp2,
                             block_size=128, compute_dtype=jnp.float32))
    ref2 = _reference(x2, wq2, wk2, wv2, wp2, bp2)
    assert jnp.allclose(out2, ref2, atol=1e-3, rtol=1e-3), "multi-tile mismatch vs reference"

    print("KERNEL_OK")
</pallas_src>

<mosaic_0001>
module attributes {stable_mosaic.version = 11 : i64} {
  func.func @_qkv_proj_kernel(%arg0: i32, %arg1: i32, %arg2: memref<1x8x32xf32, #tpu.memory_space<vmem>>, %arg3: memref<32x96xf32, #tpu.memory_space<vmem>>, %arg4: memref<1x8x96xf32, #tpu.memory_space<vmem>>) attributes {dimension_semantics = [#tpu.dimension_semantics<parallel>, #tpu.dimension_semantics<parallel>], iteration_bounds = array<i64: 2, 1>, scalar_prefetch = 0 : i64, scratch_operands = 0 : i64, tpu.core_type = #tpu.core_type<tc>, window_params = [{transform_indices = @transform_0, window_bounds = array<i64: 1, 8, 32>}, {pipeline_mode = #tpu.pipeline_mode<synchronous>, transform_indices = @transform_1, window_bounds = array<i64: 32, 96>}, {transform_indices = @transform_2, window_bounds = array<i64: 1, 8, 96>}]} {
    %c0 = arith.constant 0 : index
    %c0_0 = arith.constant 0 : index
    %c0_1 = arith.constant 0 : index
    %0 = vector.load %arg2[%c0, %c0_0, %c0_1] : memref<1x8x32xf32, #tpu.memory_space<vmem>>, vector<1x8x32xf32>
    %1 = vector.shape_cast %0 : vector<1x8x32xf32> to vector<8x32xf32>
    %c0_2 = arith.constant 0 : index
    %c0_3 = arith.constant 0 : index
    %2 = vector.load %arg3[%c0_2, %c0_3] : memref<32x96xf32, #tpu.memory_space<vmem>>, vector<32x96xf32>
    %cst = arith.constant dense<0.000000e+00> : vector<8x96xf32>
    %3 = tpu.matmul %1, %2, %cst {dimension_numbers = #tpu.dot_dimension_numbers<[1], [0], [0], [1], [0, 0, 1, 1], [], []>} : vector<8x32xf32>, vector<32x96xf32>, vector<8x96xf32> -> vector<8x96xf32>
    %c0_4 = arith.constant 0 : index
    %c0_5 = arith.constant 0 : index
    %c0_6 = arith.constant 0 : index
    %4 = vector.load %arg4[%c0_4, %c0_5, %c0_6] : memref<1x8x96xf32, #tpu.memory_space<vmem>>, vector<1x8x96xf32>
    %5 = vector.shape_cast %4 : vector<1x8x96xf32> to vector<8x96xf32>
    %6 = vector.shape_cast %3 : vector<8x96xf32> to vector<1x8x96xf32>
    tpu.vector_store %arg4[%c0_4, %c0_5, %c0_6], %6 {strides = array<i32>} : memref<1x8x96xf32, #tpu.memory_space<vmem>>, vector<1x8x96xf32>,
    return
  }
  func.func @transform_0(%arg0: i32, %arg1: i32) -> (i32, i32, i32) {
    %c0_i32 = arith.constant 0 : i32
    %c0_i32_0 = arith.constant 0 : i32
    return %arg0, %arg1, %c0_i32 : i32, i32, i32
  }
  func.func @transform_1(%arg0: i32, %arg1: i32) -> (i32, i32) {
    %c0_i32 = arith.constant 0 : i32
    %c0_i32_0 = arith.constant 0 : i32
    %c0_i32_1 = arith.constant 0 : i32
    return %c0_i32, %c0_i32_0 : i32, i32
  }
  func.func @transform_2(%arg0: i32, %arg1: i32) -> (i32, i32, i32) {
    %c0_i32 = arith.constant 0 : i32
    %c0_i32_0 = arith.constant 0 : i32
    return %arg0, %arg1, %c0_i32 : i32, i32, i32
  }
}

</mosaic_0001>

<llo_original>
// kernel: tpu_custom_call.1
$region0: #{tpu_custom_call.1}
  #allocation0 [shape = 'u32[]', space=smem, size = 0x4, offset = 0x4, fixed_abs, tag = 'smem constant byte address 0x4 - core index']
  #allocation1 [shape = 'u32[72,128]{1,0:T(1,128)}', space=vmem, size = 0x9000, scoped, tag = 'internal scratch']
  %s0 = inlined_call_operand.hbm [shape: f32[2,8,32], index: 0, kind: input, shape index: {}]
  %s1 = inlined_call_operand.hbm [shape: f32[32,96], index: 1, kind: input, shape index: {}]
  %s2 = inlined_call_operand.hbm [shape: f32[2,8,96], index: 2, kind: output, shape index: {}]
  %s3 = sld [smem:[#allocation0]]
  $region49: #{tpu_custom_call.1} parent=0
    _
  %s5 = ssub.s32 1, %s3
  %s6 = scalar_select 0, %s5, %s3
  $region1: #{tpu_custom_call.1} parent=0
    #allocation2 [shape = 'u8[8192]{0}', space=vmem, size = 0x2000, scoped, tag = 'input window, operand 0']
    #allocation3 [shape = 's32[2]{0}', space=sflag, size = 0x8, scoped, tag = 'scoped memory for tpu_custom_call.1']
    #allocation4 [shape = 's32[2]{0}', space=sflag, size = 0x8, scoped, tag = 'scoped memory for tpu_custom_call.1']
    #allocation5 [shape = 'u8[16384]{0}', space=vmem, size = 0x4000, scoped, tag = 'input window, operand 1, single buffered']
    #allocation6 [shape = 's32[1]{0}', space=sflag, size = 0x4, scoped, tag = 'scoped memory for tpu_custom_call.1']
    #allocation7 [shape = 'u8[8192]{0}', space=vmem, size = 0x2000, scoped, tag = 'output window, operand 0']
    %7 = vsyncpa [#allocation3], 0
    %s8 = scalar_lea.sflag [#allocation3], 1
    %9 = vsyncpa %s8, 0
    %10 = vsyncpa [#allocation6], 0
    %11 = vsyncpa [#allocation4], 0
    %s12 = scalar_lea.sflag [#allocation4], 1
    %13 = vsyncpa %s12, 0
    loop: start=0, step=1, limit=4
    $region2: #{tpu_custom_call.1} parent=1 // loop_pre_header
      _
    $region3: #{tpu_custom_call.1} parent=1 // loop_header
      %s15 = sphi 0, %s19
      %p16 = scmp.ge.s32.totalorder %s15, 4
      %s22 = sphi 0, %s34
      %s23 = sphi 0, %s30
      %s24 = sphi 0, %s22
      %s25 = sphi 0, %s23
      %s26 = sphi 0, %s24
      %s27 = sphi 0, %s25
      %s39 = sphi 0, %s41
      %s42 = sphi 0, %s39
      %s43 = sphi 0, %s42
      %s59 = sphi 0, %s43
      %s63 = sphi 0, %s63
      %s65 = sphi 0, %s63
      %s66 = sphi 0, %s65
      %s80 = sphi 0, %s66
      %s88 = sphi 0, %s90
      %s91 = sphi 0, %s88
      %s92 = sphi 0, %s91
      %s108 = sphi 0, %s92
    $region4: #{tpu_custom_call.1} parent=1 // loop_header_branch
      %18 = sbr.rel (%p16) target = $region8
    $region5: #{tpu_custom_call.1} parent=1 // loop_body
      %s20 = ssub.s32 %s15, 1
      %s21 = ssub.s32 %s15, 2
      %s28 = sadd.s32 1, %s23
      %p29 = scmp.ge.s32.totalorder %s28, 1
      %s30 = scalar_select %p29, 0, %s28
      %s31 = sadd.s32 1, %s22
      %s32 = scalar_select %p29, %s31, %s22
      %p33 = scmp.ge.s32.totalorder %s32, 2
      %s34 = scalar_select %p33, 0, %s32
      %s35 = ssub.s32 %s22, %s34
      %s36 = ssub.s32 %s23, %s30
      %s37 = sor.u32 %s35, %s36
      %p38 = scmp.eq.s32.totalorder %s37, 0
      %s40 = sadd.s32 %s39, 1
      %s41 = scalar_select %p38, %s39, %s40
      %p44 = pneg %p38
      %p45 = scmp.eq.s32.totalorder %s15, 1
      %p46 = por %p44, %p45
      %p47 = scmp.ne.s32.totalorder %s39, %s42
      %p48 = scmp.eq.s32.totalorder %s15, 0
      %p49 = por %p47, %p48
      %p50 = scmp.ne.s32.totalorder %s39, %s42
      %p51 = scmp.eq.s32.totalorder %s20, 1
      %p52 = por %p50, %p51
      %p53 = scmp.ne.s32.totalorder %s42, %s43
      %p54 = scmp.eq.s32.totalorder %s20, 0
      %p55 = por %p53, %p54
      %p56 = scmp.ne.s32.totalorder %s42, %s43
      %p57 = scmp.eq.s32.totalorder %s21, 1
      %p58 = por %p56, %p57
      %p60 = scmp.ne.s32.totalorder %s43, %s59
      %p61 = scmp.eq.s32.totalorder %s21, 0
      %p62 = por %p60, %p61
      %s64 = sadd.s32 %s63, 1
      %p67 = scmp.eq.s32.totalorder %s15, 1
      %p68 = scmp.ne.s32.totalorder %s63, %s65
      %p69 = scmp.eq.s32.totalorder %s15, 0
      %p70 = por %p68, %p69
      %p71 = scmp.ne.s32.totalorder %s63, %s65
      %p72 = scmp.eq.s32.totalorder %s20, 1
      %p73 = por %p71, %p72
      %p74 = scmp.ne.s32.totalorder %s65, %s66
      %p75 = scmp.eq.s32.totalorder %s20, 0
      %p76 = por %p74, %p75
      %p77 = scmp.ne.s32.totalorder %s65, %s66
      %p78 = scmp.eq.s32.totalorder %s21, 1
      %p79 = por %p77, %p78
      %p81 = scmp.ne.s32.totalorder %s66, %s80
      %p82 = scmp.eq.s32.totalorder %s21, 0
      %p83 = por %p81, %p82
      %s84 = ssub.s32 %s22, %s34
      %s85 = ssub.s32 %s23, %s30
      %s86 = sor.u32 %s84, %s85
      %p87 = scmp.eq.s32.totalorder %s86, 0
      %s89 = sadd.s32 %s88, 1
      %s90 = scalar_select %p87, %s88, %s89
      %p93 = pneg %p87
      %p94 = scmp.eq.s32.totalorder %s15, 1
      %p95 = por %p93, %p94
      %p96 = scmp.ne.s32.totalorder %s88, %s91
      %p97 = scmp.eq.s32.totalorder %s15, 0
      %p98 = por %p96, %p97
      %p99 = scmp.ne.s32.totalorder %s88, %s91
      %p100 = scmp.eq.s32.totalorder %s20, 1
      %p101 = por %p99, %p100
      %p102 = scmp.ne.s32.totalorder %s91, %s92
      %p103 = scmp.eq.s32.totalorder %s20, 0
      %p104 = por %p102, %p103
      %p105 = scmp.ne.s32.totalorder %s91, %s92
      %p106 = scmp.eq.s32.totalorder %s21, 1
      %p107 = por %p105, %p106
      %p109 = scmp.ne.s32.totalorder %s92, %s108
      %p110 = scmp.eq.s32.totalorder %s21, 0
      %p111 = por %p109, %p110
      %p112 = scmp.le.s32.totalorder 1, %s15
      %p113 = scmp.lt.s32.totalorder %s15, 3
      %p114 = pnand %p112, %p113
      %p115 = pneg %p114
      // Predicated region
      $region9: #{tpu_custom_call.1} parent=5 // pred_check
        _
      $region10: #{tpu_custom_call.1} parent=5 // pred_check_branch
        %117 = sbr.rel (%p114) target = $region12
      $region11: #{tpu_custom_call.1} parent=5 // pred_region
        %s118 = ssub.s32 %s15, 1
        // Predicated region
        $region13: #{tpu_custom_call.1} parent=11 // pred_check
          %p119 = pneg %p76
        $region14: #{tpu_custom_call.1} parent=11 // pred_check_branch
          %121 = sbr.rel (%p119) target = $region16
        $region15: #{tpu_custom_call.1} parent=11 // pred_region
          %123 = vsyncadd [#allocation6], 0
          %s124 = sshll.u32 %s1, 4
          %s125 = int_to_ptr.hbm [resolvable:$true] %s124
          %s126 = sshll.u32 [#allocation5], 4
          %s127 = int_to_ptr.vmem [resolvable:$true] %s126
          %132 = dma.hbm_to_vmem [thread:$0]  %s125, 512, %s127, [#allocation6], 128, 128, 8
        $region16: #{tpu_custom_call.1} parent=11 // pred_fallthru
          _
      $region12: #{tpu_custom_call.1} parent=5 // pred_fallthru
        _
      %p133 = scmp.lt.s32.totalorder %s15, 2
      // Predicated region
      $region17: #{tpu_custom_call.1} parent=5 // pred_check
        %p134 = pneg %p133
      $region18: #{tpu_custom_call.1} parent=5 // pred_check_branch
        %136 = sbr.rel (%p134) target = $region20
      $region19: #{tpu_custom_call.1} parent=5 // pred_region
        // Predicated region
        $region21: #{tpu_custom_call.1} parent=19 // pred_check
          %p137 = pneg %p49
        $region22: #{tpu_custom_call.1} parent=19 // pred_check_branch
          %139 = sbr.rel (%p137) target = $region24
        $region23: #{tpu_custom_call.1} parent=19 // pred_region
          %s140 = sand.u32 %s39, 1
          %s141 = scalar_lea.sflag [#allocation3], %s140
          %s142 = sand.u32 %s39, 1
          %s143 = smul.addr %s142, 8
          %s144 = scalar_lea.vmem [#allocation2], %s143
          %146 = vsyncadd %s141, 0
          %s147 = sadd.s32 %s23, %s22
          %s148 = smul.addr %s147, 8
          %s149 = scalar_lea.hbm %s0, %s148
          %s151 = sshll.u32 %s149, 4
          %s152 = int_to_ptr.hbm [resolvable:$true] %s151
          %s153 = sshll.u32 %s144, 4
          %s154 = int_to_ptr.vmem [resolvable:$true] %s153
          %156 = dma.hbm_to_vmem [thread:$0]  %s152, 128, %s154, %s141
        $region24: #{tpu_custom_call.1} parent=19 // pred_fallthru
          _
      $region20: #{tpu_custom_call.1} parent=5 // pred_fallthru
        _
      %p157 = scmp.le.s32.totalorder 1, %s15
      %p158 = scmp.lt.s32.totalorder %s15, 3
      %p159 = pnand %p157, %p158
      %p160 = pneg %p159
      // Predicated region
      $region25: #{tpu_custom_call.1} parent=5 // pred_check
        _
      $region26: #{tpu_custom_call.1} parent=5 // pred_check_branch
        %162 = sbr.rel (%p159) target = $region28
      $region27: #{tpu_custom_call.1} parent=5 // pred_region
        %s163 = ssub.s32 %s15, 1
        %s164 = sand.u32 %s42, 1
        %s165 = scalar_lea.sflag [#allocation3], %s164
        %s166 = sand.u32 %s42, 1
        %s167 = smul.addr %s166, 8
        %s168 = scalar_lea.vmem [#allocation2], %s167
        // Predicated region
        $region29: #{tpu_custom_call.1} parent=27 // pred_check
          %p169 = pneg %p55
        $region30: #{tpu_custom_call.1} parent=27 // pred_check_branch
          %171 = sbr.rel (%p169) target = $region32
        $region31: #{tpu_custom_call.1} parent=27 // pred_region
          %173 = dma.done %s165, 128
        $region32: #{tpu_custom_call.1} parent=27 // pred_fallthru
          _
        // Predicated region
        $region33: #{tpu_custom_call.1} parent=27 // pred_check
          %p174 = pneg %p76
        $region34: #{tpu_custom_call.1} parent=27 // pred_check_branch
          %176 = sbr.rel (%p174) target = $region36
        $region35: #{tpu_custom_call.1} parent=27 // pred_region
          %178 = dma.done [#allocation6], 512
        $region36: #{tpu_custom_call.1} parent=27 // pred_fallthru
          _
        %s179 = sand.u32 %s42, 1
        %s180 = scalar_lea.sflag [#allocation3], %s179
        %s181 = sand.u32 %s42, 1
        %s182 = smul.addr %s181, 8
        %s183 = scalar_lea.vmem [#allocation2], %s182
        %p184 = pneg %p55
        %p185 = pneg %p52
        %p186 = pneg %p76
        %p187 = pneg %p73
        %p188 = pneg %p104
        %p189 = pneg %p101
        %s190 = sand.u32 %s91, 1
        %s191 = scalar_lea.sflag [#allocation4], %s190
        %s192 = sand.u32 %s91, 1
        %s193 = smul.addr %s192, 8
        %s194 = scalar_lea.vmem [#allocation7], %s193
        %v195 = vld [vmem:[%s168] sm:$0xff]
        %v196 = vld [vmem:[#allocation5] sm:$0xff]
        %v197 = vld [vmem:[#allocation5 + $0x8] sm:$0xff]
        %v198 = vld [vmem:[#allocation5 + $0x10] sm:$0xff]
        %v199 = vld [vmem:[#allocation5 + $0x18] sm:$0xff]
        %vm200 = vcmask 261120
        %v202 = vsel %vm200, %v195, 0
        %204 = vmatpush.msra.mxu0 0.0
        %205 = vmatpush.msra.mxu0 0.0
        %206 = vmatpush.msra.mxu0 0.0
        %207 = vmatpush.msra.mxu0 0.0
        %208 = vmatpush.msra.mxu0 0.0
        %209 = vmatpush.msra.mxu0 0.0
        %210 = vmatpush.msra.mxu0 0.0
        %211 = vmatpush.msra.mxu0 0.0
        %212 = vmatpush.msra.mxu0 0.0
        %213 = vmatpush.msra.mxu0 0.0
        %214 = vmatpush.msra.mxu0 0.0
        %215 = vmatpush.msra.mxu0 0.0
        %216 = vmatpush.msra.mxu0 %v199
        %217 = vmatpush.msra.mxu0 %v198
        %218 = vmatpush.msra.mxu0 %v197
        %219 = vmatpush.msra.mxu0 %v196
        %220 = vmatmul.f32.gmra.mxu0 %v202
        %v221 = vpop.f32.mrf.mxu0
        %v222 = vadd.f32 0.0, %v221
        %223 = vdwg.mxu0
        %vm224 = vcmask 785408
        %225 = vst.msk [vmem:[%s194] sm:$0xff] %vm224, %v222
        %s226 = sand.u32 %s91, 1
        %s227 = scalar_lea.sflag [#allocation4], %s226
        %s228 = sand.u32 %s91, 1
        %s229 = smul.addr %s228, 8
        %s230 = scalar_lea.vmem [#allocation7], %s229
        // Predicated region
        $region37: #{tpu_custom_call.1} parent=27 // pred_check
          %p231 = pneg %p101
        $region38: #{tpu_custom_call.1} parent=27 // pred_check_branch
          %233 = sbr.rel (%p231) target = $region40
        $region39: #{tpu_custom_call.1} parent=27 // pred_region
          %235 = vsyncadd %s227, 0
          %s236 = sadd.s32 %s25, %s24
          %s237 = smul.addr %s236, 8
          %s238 = scalar_lea.hbm %s2, %s237
          %s240 = sshll.u32 %s230, 4
          %s241 = int_to_ptr.vmem [resolvable:$true] %s240
          %s242 = sshll.u32 %s238, 4
          %s243 = int_to_ptr.hbm [resolvable:$true] %s242
          %245 = dma.vmem_to_hbm [thread:$0]  %s241, 128, %s243, %s227
        $region40: #{tpu_custom_call.1} parent=27 // pred_fallthru
          _
      $region28: #{tpu_custom_call.1} parent=5 // pred_fallthru
        _
      %p246 = scmp.le.s32.totalorder 2, %s15
      // Predicated region
      $region41: #{tpu_custom_call.1} parent=5 // pred_check
        %p247 = pneg %p246
      $region42: #{tpu_custom_call.1} parent=5 // pred_check_branch
        %249 = sbr.rel (%p247) target = $region44
      $region43: #{tpu_custom_call.1} parent=5 // pred_region
        %s250 = ssub.s32 %s15, 2
        // Predicated region
        $region45: #{tpu_custom_call.1} parent=43 // pred_check
          %p251 = pneg %p107
        $region46: #{tpu_custom_call.1} parent=43 // pred_check_branch
          %253 = sbr.rel (%p251) target = $region48
        $region47: #{tpu_custom_call.1} parent=43 // pred_region
          %s254 = sand.u32 %s92, 1
          %s255 = scalar_lea.sflag [#allocation4], %s254
          %s256 = sand.u32 %s92, 1
          %s257 = smul.addr %s256, 8
          %s258 = scalar_lea.vmem [#allocation7], %s257
          %260 = dma.done %s255, 128
        $region48: #{tpu_custom_call.1} parent=43 // pred_fallthru
          _
      $region44: #{tpu_custom_call.1} parent=5 // pred_fallthru
        _
    $region6: #{tpu_custom_call.1} parent=1 // loop_footer
      %s19 = sadd.s32 1, %s15
    $region7: #{tpu_custom_call.1} parent=1 // loop_footer_branch
      %14 = sbr.rel target = $region3
    $region8: #{tpu_custom_call.1} parent=1 // loop_exit
      _
    %261 = vsyncpa [#allocation3], 1
    %s262 = scalar_lea.sflag [#allocation3], 1
    %263 = vsyncpa %s262, 1
    %264 = vsyncpa [#allocation6], 1
    %265 = vsyncpa [#allocation4], 1
    %s266 = scalar_lea.sflag [#allocation4], 1
    %267 = vsyncpa %s266, 1

</llo_original>
